<compile_context>
chip_gen: v6e
topology: v6e:2x2x1
jax: 0.10.0
libtpu: 0.0.40
codegen_flags: <defaults>
</compile_context>

<pallas_src>
import functools
import math

import jax
import jax.numpy as jnp
from jax.experimental import pallas as pl
from jax.experimental.pallas import tpu as pltpu


def _dice_partial_sums_kernel(x_ref, t_ref, inter_ref, psq_ref, tsq_ref,
                              inter_acc, psq_acc, tsq_acc, *,
                              hw, tile_s, normalization, needs_mask):
    s = pl.program_id(1)          # spatial tile index (reduction axis, last in grid)
    ns = pl.num_programs(1)

    # Init the per-batch accumulators at the first spatial tile.
    @pl.when(s == 0)
    def _():
        inter_acc[...] = jnp.zeros_like(inter_acc)
        psq_acc[...] = jnp.zeros_like(psq_acc)
        tsq_acc[...] = jnp.zeros_like(tsq_acc)

    # Cast on the VMEM tile (keeps the HBM streams in the input dtype, e.g. bf16).
    x = x_ref[...].astype(jnp.float32)   # (C, TS)
    t = t_ref[...].astype(jnp.float32)   # (C, TS)

    if normalization == "sigmoid":
        p = jax.nn.sigmoid(x)
    elif normalization == "softmax":
        p = jax.nn.softmax(x, axis=0)    # channel axis (dim=1 of NCHW) is axis 0 here
    else:
        p = x

    if needs_mask:
        # Mask the ragged spatial tail of the last tile (padding must not reach the sums,
        # since sigmoid(pad) != 0 and padded lanes are undefined).
        col = s * tile_s + jax.lax.broadcasted_iota(jnp.int32, p.shape, 1)
        valid = col < hw
        p = jnp.where(valid, p, 0.0)
        t = jnp.where(valid, t, 0.0)

    inter_acc[...] += jnp.sum(p * t, axis=1, keepdims=True)
    psq_acc[...] += jnp.sum(p * p, axis=1, keepdims=True)
    tsq_acc[...] += jnp.sum(t * t, axis=1, keepdims=True)

    # Store the per-batch sums once, at the last spatial tile.
    @pl.when(s == ns - 1)
    def _():
        inter_ref[...] = inter_acc[...]
        psq_ref[...] = psq_acc[...]
        tsq_ref[...] = tsq_acc[...]


def _round_up(x, m):
    return ((x + m - 1) // m) * m


def dice_loss(inputs, target, weight=None, normalization="sigmoid", epsilon=1e-6):
    """Pallas equivalent of _AbstractDiceLoss.forward (standard per-channel Dice)."""
    assert inputs.shape == target.shape
    assert inputs.ndim >= 3, "expected (N, C, *spatial)"
    assert normalization in ("sigmoid", "softmax", "none")

    n, c = int(inputs.shape[0]), int(inputs.shape[1])
    hw = math.prod(int(d) for d in inputs.shape[2:])

    # Contiguous (free) reshape; no transpose / pad / upcast copies in the wrapper.
    x3 = inputs.reshape(n, c, hw)
    t3 = target.reshape(n, c, hw)

    # Tile size: lane-dense multiple of 128, ~512 KiB of input dtype per tile
    # (x2 inputs x2 pipeline buffers plus f32 temporaries -> well within scoped VMEM).
    itemsize = jnp.dtype(inputs.dtype).itemsize
    budget_bytes = 512 * 1024
    ts_cap = max(128, ((budget_bytes // (itemsize * c)) // 128) * 128)
    ts = min(_round_up(hw, 128), ts_cap)
    ns = -(-hw // ts)

    kernel = functools.partial(
        _dice_partial_sums_kernel,
        hw=hw,
        tile_s=ts,
        normalization=normalization,
        needs_mask=(ns * ts != hw),
    )

    in_spec = pl.BlockSpec((pl.Squeezed(), c, ts), lambda b, s: (b, 0, s))
    out_spec = pl.BlockSpec((pl.Squeezed(), c, 1), lambda b, s: (b, 0, 0))

    inter, psq, tsq = pl.pallas_call(
        kernel,
        out_shape=(
            jax.ShapeDtypeStruct((n, c, 1), jnp.float32),
            jax.ShapeDtypeStruct((n, c, 1), jnp.float32),
            jax.ShapeDtypeStruct((n, c, 1), jnp.float32),
        ),
        grid=(n, ns),
        in_specs=[in_spec, in_spec],
        out_specs=(out_spec, out_spec, out_spec),
        scratch_shapes=[
            pltpu.VMEM((c, 1), jnp.float32),
            pltpu.VMEM((c, 1), jnp.float32),
            pltpu.VMEM((c, 1), jnp.float32),
        ],
        compiler_params=pltpu.CompilerParams(
            dimension_semantics=("parallel", "arbitrary")),
    )(x3, t3)

    # O(C) finalization outside the kernel (weight buffer applies to the intersection,
    # matching compute_per_channel_dice, which flattens over batch+spatial per channel).
    intersect = jnp.sum(inter[:, :, 0], axis=0)                     # (C,)
    if weight is not None:
        intersect = jnp.asarray(weight, jnp.float32) * intersect
    denominator = jnp.sum(psq[:, :, 0], axis=0) + jnp.sum(tsq[:, :, 0], axis=0)
    per_channel_dice = 2.0 * intersect / jnp.maximum(denominator, epsilon)
    return 1.0 - jnp.mean(per_channel_dice)


if __name__ == "__main__":
    key = jax.random.PRNGKey(0)
    k1, k2 = jax.random.split(key)

    # (N, C, H, W) logits and binary target, sigmoid normalization (module default).
    x = jax.random.normal(k1, (2, 4, 16, 16), jnp.float32)
    t = jax.random.bernoulli(k2, 0.5, (2, 4, 16, 16)).astype(jnp.float32)

    loss = dice_loss(x, t, weight=None, normalization="sigmoid")
    jax.block_until_ready(loss)

    # Pure-JAX reference (mirrors the PyTorch module with the standard dice()).
    p = jax.nn.sigmoid(x)
    c = x.shape[1]
    pf = jnp.moveaxis(p, 1, 0).reshape(c, -1)
    tf = jnp.moveaxis(t, 1, 0).reshape(c, -1)
    inter_ref = jnp.sum(pf * tf, axis=1)
    denom_ref = jnp.sum(pf * pf, axis=1) + jnp.sum(tf * tf, axis=1)
    ref = 1.0 - jnp.mean(2.0 * inter_ref / jnp.maximum(denom_ref, 1e-6))

    assert jnp.allclose(loss, ref, rtol=1e-5, atol=1e-5), (loss, ref)
    print("KERNEL_OK")
</pallas_src>

<mosaic_0001>
module attributes {stable_mosaic.version = 11 : i64} {
  func.func @_dice_partial_sums_kernel(%arg0: i32, %arg1: i32, %arg2: memref<1x4x256xf32, #tpu.memory_space<vmem>>, %arg3: memref<1x4x256xf32, #tpu.memory_space<vmem>>, %arg4: memref<1x4x1xf32, #tpu.memory_space<vmem>>, %arg5: memref<1x4x1xf32, #tpu.memory_space<vmem>>, %arg6: memref<1x4x1xf32, #tpu.memory_space<vmem>>, %arg7: memref<4x1xf32, #tpu.memory_space<vmem>>, %arg8: memref<4x1xf32, #tpu.memory_space<vmem>>, %arg9: memref<4x1xf32, #tpu.memory_space<vmem>>) attributes {dimension_semantics = [#tpu.dimension_semantics<parallel>, #tpu.dimension_semantics<arbitrary>], iteration_bounds = array<i64: 2, 1>, scalar_prefetch = 0 : i64, scratch_operands = 3 : i64, tpu.core_type = #tpu.core_type<tc>, window_params = [{transform_indices = @transform_0, window_bounds = array<i64: 1, 4, 256>}, {transform_indices = @transform_1, window_bounds = array<i64: 1, 4, 256>}, {transform_indices = @transform_2, window_bounds = array<i64: 1, 4, 1>}, {transform_indices = @transform_3, window_bounds = array<i64: 1, 4, 1>}, {transform_indices = @transform_4, window_bounds = array<i64: 1, 4, 1>}]} {
    %c0_i32 = arith.constant 0 : i32
    %0 = arith.cmpi eq, %arg1, %c0_i32 : i32
    %1 = arith.extui %0 : i1 to i32
    %c0_i32_0 = arith.constant 0 : i32
    %2 = arith.cmpi ne, %1, %c0_i32_0 : i32
    scf.if %2 {
      %cst_23 = arith.constant 0.000000e+00 : f32
      %33 = vector.broadcast %cst_23 : f32 to vector<4x1xf32>
      %c0_24 = arith.constant 0 : index
      %c0_25 = arith.constant 0 : index
      %34 = vector.load %arg7[%c0_24, %c0_25] : memref<4x1xf32, #tpu.memory_space<vmem>>, vector<4x1xf32>
      tpu.vector_store %arg7[%c0_24, %c0_25], %33 {strides = array<i32>} : memref<4x1xf32, #tpu.memory_space<vmem>>, vector<4x1xf32>,
      %cst_26 = arith.constant 0.000000e+00 : f32
      %35 = vector.broadcast %cst_26 : f32 to vector<4x1xf32>
      %c0_27 = arith.constant 0 : index
      %c0_28 = arith.constant 0 : index
      %36 = vector.load %arg8[%c0_27, %c0_28] : memref<4x1xf32, #tpu.memory_space<vmem>>, vector<4x1xf32>
      tpu.vector_store %arg8[%c0_27, %c0_28], %35 {strides = array<i32>} : memref<4x1xf32, #tpu.memory_space<vmem>>, vector<4x1xf32>,
      %cst_29 = arith.constant 0.000000e+00 : f32
      %37 = vector.broadcast %cst_29 : f32 to vector<4x1xf32>
      %c0_30 = arith.constant 0 : index
      %c0_31 = arith.constant 0 : index
      %38 = vector.load %arg9[%c0_30, %c0_31] : memref<4x1xf32, #tpu.memory_space<vmem>>, vector<4x1xf32>
      tpu.vector_store %arg9[%c0_30, %c0_31], %37 {strides = array<i32>} : memref<4x1xf32, #tpu.memory_space<vmem>>, vector<4x1xf32>,
    } else {
    }
    %c0 = arith.constant 0 : index
    %c0_1 = arith.constant 0 : index
    %c0_2 = arith.constant 0 : index
    %3 = vector.load %arg2[%c0, %c0_1, %c0_2] : memref<1x4x256xf32, #tpu.memory_space<vmem>>, vector<1x4x256xf32>
    %4 = vector.shape_cast %3 : vector<1x4x256xf32> to vector<4x256xf32>
    %c0_3 = arith.constant 0 : index
    %c0_4 = arith.constant 0 : index
    %c0_5 = arith.constant 0 : index
    %5 = vector.load %arg3[%c0_3, %c0_4, %c0_5] : memref<1x4x256xf32, #tpu.memory_space<vmem>>, vector<1x4x256xf32>
    %6 = vector.shape_cast %5 : vector<1x4x256xf32> to vector<4x256xf32>
    %7 = arith.negf %4 : vector<4x256xf32>
    %8 = math.exp %7 : vector<4x256xf32>
    %cst = arith.constant 1.000000e+00 : f32
    %9 = vector.broadcast %cst : f32 to vector<4x256xf32>
    %10 = arith.addf %9, %8 : vector<4x256xf32>
    %11 = arith.divf %9, %10 : vector<4x256xf32>
    %c0_6 = arith.constant 0 : index
    %c0_7 = arith.constant 0 : index
    %12 = vector.load %arg7[%c0_6, %c0_7] : memref<4x1xf32, #tpu.memory_space<vmem>>, vector<4x1xf32>
    %13 = arith.mulf %11, %6 : vector<4x256xf32>
    %cst_8 = arith.constant dense<0.000000e+00> : vector<4xf32>
    %14 = vector.multi_reduction <add>, %13, %cst_8 [1] : vector<4x256xf32> to vector<4xf32>
    %15 = vector.shape_cast %14 : vector<4xf32> to vector<4x1xf32>
    %16 = arith.addf %12, %15 : vector<4x1xf32>
    %c0_9 = arith.constant 0 : index
    %c0_10 = arith.constant 0 : index
    %17 = vector.load %arg7[%c0_9, %c0_10] : memref<4x1xf32, #tpu.memory_space<vmem>>, vector<4x1xf32>
    tpu.vector_store %arg7[%c0_9, %c0_10], %16 {strides = array<i32>} : memref<4x1xf32, #tpu.memory_space<vmem>>, vector<4x1xf32>,
    %c0_11 = arith.constant 0 : index
    %c0_12 = arith.constant 0 : index
    %18 = vector.load %arg8[%c0_11, %c0_12] : memref<4x1xf32, #tpu.memory_space<vmem>>, vector<4x1xf32>
    %19 = arith.mulf %11, %11 : vector<4x256xf32>
    %cst_13 = arith.constant dense<0.000000e+00> : vector<4xf32>
    %20 = vector.multi_reduction <add>, %19, %cst_13 [1] : vector<4x256xf32> to vector<4xf32>
    %21 = vector.shape_cast %20 : vector<4xf32> to vector<4x1xf32>
    %22 = arith.addf %18, %21 : vector<4x1xf32>
    %c0_14 = arith.constant 0 : index
    %c0_15 = arith.constant 0 : index
    %23 = vector.load %arg8[%c0_14, %c0_15] : memref<4x1xf32, #tpu.memory_space<vmem>>, vector<4x1xf32>
    tpu.vector_store %arg8[%c0_14, %c0_15], %22 {strides = array<i32>} : memref<4x1xf32, #tpu.memory_space<vmem>>, vector<4x1xf32>,
    %c0_16 = arith.constant 0 : index
    %c0_17 = arith.constant 0 : index
    %24 = vector.load %arg9[%c0_16, %c0_17] : memref<4x1xf32, #tpu.memory_space<vmem>>, vector<4x1xf32>
    %25 = arith.mulf %6, %6 : vector<4x256xf32>
    %cst_18 = arith.constant dense<0.000000e+00> : vector<4xf32>
    %26 = vector.multi_reduction <add>, %25, %cst_18 [1] : vector<4x256xf32> to vector<4xf32>
    %27 = vector.shape_cast %26 : vector<4xf32> to vector<4x1xf32>
    %28 = arith.addf %24, %27 : vector<4x1xf32>
    %c0_19 = arith.constant 0 : index
    %c0_20 = arith.constant 0 : index
    %29 = vector.load %arg9[%c0_19, %c0_20] : memref<4x1xf32, #tpu.memory_space<vmem>>, vector<4x1xf32>
    tpu.vector_store %arg9[%c0_19, %c0_20], %28 {strides = array<i32>} : memref<4x1xf32, #tpu.memory_space<vmem>>, vector<4x1xf32>,
    %c0_i32_21 = arith.constant 0 : i32
    %30 = arith.cmpi eq, %arg1, %c0_i32_21 : i32
    %31 = arith.extui %30 : i1 to i32
    %c0_i32_22 = arith.constant 0 : i32
    %32 = arith.cmpi ne, %31, %c0_i32_22 : i32
    scf.if %32 {
      %c0_23 = arith.constant 0 : index
      %c0_24 = arith.constant 0 : index
      %33 = vector.load %arg7[%c0_23, %c0_24] : memref<4x1xf32, #tpu.memory_space<vmem>>, vector<4x1xf32>
      %c0_25 = arith.constant 0 : index
      %c0_26 = arith.constant 0 : index
      %c0_27 = arith.constant 0 : index
      %34 = vector.load %arg4[%c0_25, %c0_26, %c0_27] : memref<1x4x1xf32, #tpu.memory_space<vmem>>, vector<1x4x1xf32>
      %35 = vector.shape_cast %34 : vector<1x4x1xf32> to vector<4x1xf32>
      %36 = vector.shape_cast %33 : vector<4x1xf32> to vector<1x4x1xf32>
      tpu.vector_store %arg4[%c0_25, %c0_26, %c0_27], %36 {strides = array<i32>} : memref<1x4x1xf32, #tpu.memory_space<vmem>>, vector<1x4x1xf32>,
      %c0_28 = arith.constant 0 : index
      %c0_29 = arith.constant 0 : index
      %37 = vector.load %arg8[%c0_28, %c0_29] : memref<4x1xf32, #tpu.memory_space<vmem>>, vector<4x1xf32>
      %c0_30 = arith.constant 0 : index
      %c0_31 = arith.constant 0 : index
      %c0_32 = arith.constant 0 : index
      %38 = vector.load %arg5[%c0_30, %c0_31, %c0_32] : memref<1x4x1xf32, #tpu.memory_space<vmem>>, vector<1x4x1xf32>
      %39 = vector.shape_cast %38 : vector<1x4x1xf32> to vector<4x1xf32>
      %40 = vector.shape_cast %37 : vector<4x1xf32> to vector<1x4x1xf32>
      tpu.vector_store %arg5[%c0_30, %c0_31, %c0_32], %40 {strides = array<i32>} : memref<1x4x1xf32, #tpu.memory_space<vmem>>, vector<1x4x1xf32>,
      %c0_33 = arith.constant 0 : index
      %c0_34 = arith.constant 0 : index
      %41 = vector.load %arg9[%c0_33, %c0_34] : memref<4x1xf32, #tpu.memory_space<vmem>>, vector<4x1xf32>
      %c0_35 = arith.constant 0 : index
      %c0_36 = arith.constant 0 : index
      %c0_37 = arith.constant 0 : index
      %42 = vector.load %arg6[%c0_35, %c0_36, %c0_37] : memref<1x4x1xf32, #tpu.memory_space<vmem>>, vector<1x4x1xf32>
      %43 = vector.shape_cast %42 : vector<1x4x1xf32> to vector<4x1xf32>
      %44 = vector.shape_cast %41 : vector<4x1xf32> to vector<1x4x1xf32>
      tpu.vector_store %arg6[%c0_35, %c0_36, %c0_37], %44 {strides = array<i32>} : memref<1x4x1xf32, #tpu.memory_space<vmem>>, vector<1x4x1xf32>,
    } else {
    }
    return
  }
  func.func @transform_0(%arg0: i32, %arg1: i32) -> (i32, i32, i32) {
    %c0_i32 = arith.constant 0 : i32
    %c0_i32_0 = arith.constant 0 : i32
    return %arg0, %c0_i32, %arg1 : i32, i32, i32
  }
  func.func @transform_1(%arg0: i32, %arg1: i32) -> (i32, i32, i32) {
    %c0_i32 = arith.constant 0 : i32
    %c0_i32_0 = arith.constant 0 : i32
    return %arg0, %c0_i32, %arg1 : i32, i32, i32
  }
  func.func @transform_2(%arg0: i32, %arg1: i32) -> (i32, i32, i32) {
    %c0_i32 = arith.constant 0 : i32
    %c0_i32_0 = arith.constant 0 : i32
    %c0_i32_1 = arith.constant 0 : i32
    return %arg0, %c0_i32, %c0_i32_0 : i32, i32, i32
  }
  func.func @transform_3(%arg0: i32, %arg1: i32) -> (i32, i32, i32) {
    %c0_i32 = arith.constant 0 : i32
    %c0_i32_0 = arith.constant 0 : i32
    %c0_i32_1 = arith.constant 0 : i32
    return %arg0, %c0_i32, %c0_i32_0 : i32, i32, i32
  }
  func.func @transform_4(%arg0: i32, %arg1: i32) -> (i32, i32, i32) {
    %c0_i32 = arith.constant 0 : i32
    %c0_i32_0 = arith.constant 0 : i32
    %c0_i32_1 = arith.constant 0 : i32
    return %arg0, %c0_i32, %c0_i32_0 : i32, i32, i32
  }
}

</mosaic_0001>

<llo_original>
// kernel: tpu_custom_call.1
$region0: #{tpu_custom_call.1}
  #allocation0 [shape = 'u32[]', space=smem, size = 0x4, offset = 0x4, fixed_abs, tag = 'smem constant byte address 0x4 - core index']
  #allocation1 [shape = 'u32[144,128]{1,0:T(1,128)}', space=vmem, size = 0x12000, scoped, tag = 'internal scratch']
  #allocation2 [shape = 'f32[4,1]{1,0:T(4,128)}', space=vmem, size = 0x800, scoped, tag = 'scratch operand']
  #allocation3 [shape = 'f32[4,1]{1,0:T(4,128)}', space=vmem, size = 0x800, scoped, tag = 'scratch operand']
  #allocation4 [shape = 'f32[4,1]{1,0:T(4,128)}', space=vmem, size = 0x800, scoped, tag = 'scratch operand']
  %s0 = inlined_call_operand.hbm [shape: f32[2,4,256], index: 0, kind: input, shape index: {}]
  %s1 = inlined_call_operand.hbm [shape: f32[2,4,256], index: 1, kind: input, shape index: {}]
  %s2 = inlined_call_operand.vmem [shape: f32[2,4,1], index: 2, kind: output, shape index: {0}]
  %s3 = inlined_call_operand.vmem [shape: f32[2,4,1], index: 3, kind: output, shape index: {1}]
  %s4 = inlined_call_operand.vmem [shape: f32[2,4,1], index: 4, kind: output, shape index: {2}]
  %5 = xla_tuple %s2, %s3, %s4
  %s6 = sld [smem:[#allocation0]]
  $region73: #{tpu_custom_call.1} parent=0
    _
  %s8 = ssub.s32 1, %s6
  %s9 = scalar_select 0, %s8, %s6
  $region1: #{tpu_custom_call.1} parent=0
    #allocation5 [shape = 'u8[8192]{0}', space=vmem, size = 0x2000, scoped, tag = 'input window, operand 0']
    #allocation6 [shape = 's32[2]{0}', space=sflag, size = 0x8, scoped, tag = 'scoped memory for tpu_custom_call.1']
    #allocation7 [shape = 'u8[8192]{0}', space=vmem, size = 0x2000, scoped, tag = 'input window, operand 1']
    #allocation8 [shape = 's32[2]{0}', space=sflag, size = 0x8, scoped, tag = 'scoped memory for tpu_custom_call.1']
    %10 = vsyncpa [#allocation6], 0
    %s11 = scalar_lea.sflag [#allocation6], 1
    %12 = vsyncpa %s11, 0
    %13 = vsyncpa [#allocation8], 0
    %s14 = scalar_lea.sflag [#allocation8], 1
    %15 = vsyncpa %s14, 0
    loop: start=0, step=1, limit=4
    $region2: #{tpu_custom_call.1} parent=1 // loop_pre_header
      _
    $region3: #{tpu_custom_call.1} parent=1 // loop_header
      %s17 = sphi 0, %s21
      %p18 = scmp.ge.s32.totalorder %s17, 4
      %s24 = sphi 0, %s36
      %s25 = sphi 0, %s32
      %s26 = sphi 0, %s24
      %s27 = sphi 0, %s25
      %s28 = sphi 0, %s26
      %s29 = sphi 0, %s27
      %s41 = sphi 0, %s43
      %s44 = sphi 0, %s41
      %s45 = sphi 0, %s44
      %s61 = sphi 0, %s45
      %s69 = sphi 0, %s71
      %s72 = sphi 0, %s69
      %s73 = sphi 0, %s72
      %s89 = sphi 0, %s73
      %s95 = sphi 0, %s97
      %s98 = sphi 0, %s95
      %s99 = sphi 0, %s98
      %s115 = sphi 0, %s99
      %s121 = sphi 0, %s123
      %s124 = sphi 0, %s121
      %s125 = sphi 0, %s124
      %s141 = sphi 0, %s125
      %s147 = sphi 0, %s149
      %s150 = sphi 0, %s147
      %s151 = sphi 0, %s150
      %s167 = sphi 0, %s151
    $region4: #{tpu_custom_call.1} parent=1 // loop_header_branch
      %20 = sbr.rel (%p18) target = $region8
    $region5: #{tpu_custom_call.1} parent=1 // loop_body
      %s22 = ssub.s32 %s17, 1
      %s23 = ssub.s32 %s17, 2
      %s30 = sadd.s32 1, %s25
      %p31 = scmp.ge.s32.totalorder %s30, 1
      %s32 = scalar_select %p31, 0, %s30
      %s33 = sadd.s32 1, %s24
      %s34 = scalar_select %p31, %s33, %s24
      %p35 = scmp.ge.s32.totalorder %s34, 2
      %s36 = scalar_select %p35, 0, %s34
      %s37 = ssub.s32 %s24, %s36
      %s38 = ssub.s32 %s25, %s32
      %s39 = sor.u32 %s37, %s38
      %p40 = scmp.eq.s32.totalorder %s39, 0
      %s42 = sadd.s32 %s41, 1
      %s43 = scalar_select %p40, %s41, %s42
      %p46 = pneg %p40
      %p47 = scmp.eq.s32.totalorder %s17, 1
      %p48 = por %p46, %p47
      %p49 = scmp.ne.s32.totalorder %s41, %s44
      %p50 = scmp.eq.s32.totalorder %s17, 0
      %p51 = por %p49, %p50
      %p52 = scmp.ne.s32.totalorder %s41, %s44
      %p53 = scmp.eq.s32.totalorder %s22, 1
      %p54 = por %p52, %p53
      %p55 = scmp.ne.s32.totalorder %s44, %s45
      %p56 = scmp.eq.s32.totalorder %s22, 0
      %p57 = por %p55, %p56
      %p58 = scmp.ne.s32.totalorder %s44, %s45
      %p59 = scmp.eq.s32.totalorder %s23, 1
      %p60 = por %p58, %p59
      %p62 = scmp.ne.s32.totalorder %s45, %s61
      %p63 = scmp.eq.s32.totalorder %s23, 0
      %p64 = por %p62, %p63
      %s65 = ssub.s32 %s24, %s36
      %s66 = ssub.s32 %s25, %s32
      %s67 = sor.u32 %s65, %s66
      %p68 = scmp.eq.s32.totalorder %s67, 0
      %s70 = sadd.s32 %s69, 1
      %s71 = scalar_select %p68, %s69, %s70
      %p74 = pneg %p68
      %p75 = scmp.eq.s32.totalorder %s17, 1
      %p76 = por %p74, %p75
      %p77 = scmp.ne.s32.totalorder %s69, %s72
      %p78 = scmp.eq.s32.totalorder %s17, 0
      %p79 = por %p77, %p78
      %p80 = scmp.ne.s32.totalorder %s69, %s72
      %p81 = scmp.eq.s32.totalorder %s22, 1
      %p82 = por %p80, %p81
      %p83 = scmp.ne.s32.totalorder %s72, %s73
      %p84 = scmp.eq.s32.totalorder %s22, 0
      %p85 = por %p83, %p84
      %p86 = scmp.ne.s32.totalorder %s72, %s73
      %p87 = scmp.eq.s32.totalorder %s23, 1
      %p88 = por %p86, %p87
      %p90 = scmp.ne.s32.totalorder %s73, %s89
      %p91 = scmp.eq.s32.totalorder %s23, 0
      %p92 = por %p90, %p91
      %s93 = ssub.s32 %s24, %s36
      %p94 = scmp.eq.s32.totalorder %s93, 0
      %s96 = sadd.s32 %s95, 1
      %s97 = scalar_select %p94, %s95, %s96
      %p100 = pneg %p94
      %p101 = scmp.eq.s32.totalorder %s17, 1
      %p102 = por %p100, %p101
      %p103 = scmp.ne.s32.totalorder %s95, %s98
      %p104 = scmp.eq.s32.totalorder %s17, 0
      %p105 = por %p103, %p104
      %p106 = scmp.ne.s32.totalorder %s95, %s98
      %p107 = scmp.eq.s32.totalorder %s22, 1
      %p108 = por %p106, %p107
      %p109 = scmp.ne.s32.totalorder %s98, %s99
      %p110 = scmp.eq.s32.totalorder %s22, 0
      %p111 = por %p109, %p110
      %p112 = scmp.ne.s32.totalorder %s98, %s99
      %p113 = scmp.eq.s32.totalorder %s23, 1
      %p114 = por %p112, %p113
      %p116 = scmp.ne.s32.totalorder %s99, %s115
      %p117 = scmp.eq.s32.totalorder %s23, 0
      %p118 = por %p116, %p117
      %s119 = ssub.s32 %s24, %s36
      %p120 = scmp.eq.s32.totalorder %s119, 0
      %s122 = sadd.s32 %s121, 1
      %s123 = scalar_select %p120, %s121, %s122
      %p126 = pneg %p120
      %p127 = scmp.eq.s32.totalorder %s17, 1
      %p128 = por %p126, %p127
      %p129 = scmp.ne.s32.totalorder %s121, %s124
      %p130 = scmp.eq.s32.totalorder %s17, 0
      %p131 = por %p129, %p130
      %p132 = scmp.ne.s32.totalorder %s121, %s124
      %p133 = scmp.eq.s32.totalorder %s22, 1
      %p134 = por %p132, %p133
      %p135 = scmp.ne.s32.totalorder %s124, %s125
      %p136 = scmp.eq.s32.totalorder %s22, 0
      %p137 = por %p135, %p136
      %p138 = scmp.ne.s32.totalorder %s124, %s125
      %p139 = scmp.eq.s32.totalorder %s23, 1
      %p140 = por %p138, %p139
      %p142 = scmp.ne.s32.totalorder %s125, %s141
      %p143 = scmp.eq.s32.totalorder %s23, 0
      %p144 = por %p142, %p143
      %s145 = ssub.s32 %s24, %s36
      %p146 = scmp.eq.s32.totalorder %s145, 0
      %s148 = sadd.s32 %s147, 1
      %s149 = scalar_select %p146, %s147, %s148
      %p152 = pneg %p146
      %p153 = scmp.eq.s32.totalorder %s17, 1
      %p154 = por %p152, %p153
      %p155 = scmp.ne.s32.totalorder %s147, %s150
      %p156 = scmp.eq.s32.totalorder %s17, 0
      %p157 = por %p155, %p156
      %p158 = scmp.ne.s32.totalorder %s147, %s150
      %p159 = scmp.eq.s32.totalorder %s22, 1
      %p160 = por %p158, %p159
      %p161 = scmp.ne.s32.totalorder %s150, %s151
      %p162 = scmp.eq.s32.totalorder %s22, 0
      %p163 = por %p161, %p162
      %p164 = scmp.ne.s32.totalorder %s150, %s151
      %p165 = scmp.eq.s32.totalorder %s23, 1
      %p166 = por %p164, %p165
      %p168 = scmp.ne.s32.totalorder %s151, %s167
      %p169 = scmp.eq.s32.totalorder %s23, 0
      %p170 = por %p168, %p169
      %p171 = scmp.le.s32.totalorder 1, %s17
      %p172 = scmp.lt.s32.totalorder %s17, 3
      %p173 = pnand %p171, %p172
      %p174 = pneg %p173
      // Predicated region
      $region9: #{tpu_custom_call.1} parent=5 // pred_check
        _
      $region10: #{tpu_custom_call.1} parent=5 // pred_check_branch
        %176 = sbr.rel (%p173) target = $region12
      $region11: #{tpu_custom_call.1} parent=5 // pred_region
        %s177 = ssub.s32 %s17, 1
      $region12: #{tpu_custom_call.1} parent=5 // pred_fallthru
        _
      %p178 = scmp.lt.s32.totalorder %s17, 2
      // Predicated region
      $region13: #{tpu_custom_call.1} parent=5 // pred_check
        %p179 = pneg %p178
      $region14: #{tpu_custom_call.1} parent=5 // pred_check_branch
        %181 = sbr.rel (%p179) target = $region16
      $region15: #{tpu_custom_call.1} parent=5 // pred_region
        // Predicated region
        $region17: #{tpu_custom_call.1} parent=15 // pred_check
          %p182 = pneg %p51
        $region18: #{tpu_custom_call.1} parent=15 // pred_check_branch
          %184 = sbr.rel (%p182) target = $region20
        $region19: #{tpu_custom_call.1} parent=15 // pred_region
          %s185 = sand.u32 %s41, 1
          %s186 = scalar_lea.sflag [#allocation6], %s185
          %s187 = sand.u32 %s41, 1
          %s188 = smul.addr %s187, 8
          %s189 = scalar_lea.vmem [#allocation5], %s188
          %s190 = smul.u32 2, %s25
          %s192 = ssub.s32 128, 128
          %193 = vsyncadd %s186, %s192
          %s194 = smul.addr %s24, 2
          %s195 = sadd.s32 %s190, %s194
          %s196 = smul.addr %s195, 64
          %s197 = scalar_lea.hbm %s0, %s196
          %s199 = sshll.u32 %s189, 4
          %s200 = int_to_ptr.vmem [resolvable:$true] %s199
          %202 = dma.hbm_to_vmem [thread:$0]  %s197, 128, %s200, %s186
        $region20: #{tpu_custom_call.1} parent=15 // pred_fallthru
          _
        // Predicated region
        $region21: #{tpu_custom_call.1} parent=15 // pred_check
          %p203 = pneg %p79
        $region22: #{tpu_custom_call.1} parent=15 // pred_check_branch
          %205 = sbr.rel (%p203) target = $region24
        $region23: #{tpu_custom_call.1} parent=15 // pred_region
          %s206 = sand.u32 %s69, 1
          %s207 = scalar_lea.sflag [#allocation8], %s206
          %s208 = sand.u32 %s69, 1
          %s209 = smul.addr %s208, 8
          %s210 = scalar_lea.vmem [#allocation7], %s209
          %s211 = smul.u32 2, %s25
          %s213 = ssub.s32 128, 128
          %214 = vsyncadd %s207, %s213
          %s215 = smul.addr %s24, 2
          %s216 = sadd.s32 %s211, %s215
          %s217 = smul.addr %s216, 64
          %s218 = scalar_lea.hbm %s1, %s217
          %s220 = sshll.u32 %s210, 4
          %s221 = int_to_ptr.vmem [resolvable:$true] %s220
          %223 = dma.hbm_to_vmem [thread:$0]  %s218, 128, %s221, %s207
        $region24: #{tpu_custom_call.1} parent=15 // pred_fallthru
          _
      $region16: #{tpu_custom_call.1} parent=5 // pred_fallthru
        _
      %p224 = scmp.le.s32.totalorder 1, %s17
      %p225 = scmp.lt.s32.totalorder %s17, 3
      %p226 = pnand %p224, %p225
      %p227 = pneg %p226
      // Predicated region
      $region25: #{tpu_custom_call.1} parent=5 // pred_check
        _
      $region26: #{tpu_custom_call.1} parent=5 // pred_check_branch
        %229 = sbr.rel (%p226) target = $region28
      $region27: #{tpu_custom_call.1} parent=5 // pred_region
        %s230 = ssub.s32 %s17, 1
        %s231 = sand.u32 %s44, 1
        %s232 = scalar_lea.sflag [#allocation6], %s231
        %s233 = sand.u32 %s44, 1
        %s234 = smul.addr %s233, 8
        %s235 = scalar_lea.vmem [#allocation5], %s234
        // Predicated region
        $region29: #{tpu_custom_call.1} parent=27 // pred_check
          %p236 = pneg %p57
        $region30: #{tpu_custom_call.1} parent=27 // pred_check_branch
          %238 = sbr.rel (%p236) target = $region32
        $region31: #{tpu_custom_call.1} parent=27 // pred_region
          %239 = dma.done %s232, 128
        $region32: #{tpu_custom_call.1} parent=27 // pred_fallthru
          _
        %s240 = sand.u32 %s72, 1
        %s241 = scalar_lea.sflag [#allocation8], %s240
        %s242 = sand.u32 %s72, 1
        %s243 = smul.addr %s242, 8
        %s244 = scalar_lea.vmem [#allocation7], %s243
        // Predicated region
        $region33: #{tpu_custom_call.1} parent=27 // pred_check
          %p245 = pneg %p85
        $region34: #{tpu_custom_call.1} parent=27 // pred_check_branch
          %247 = sbr.rel (%p245) target = $region36
        $region35: #{tpu_custom_call.1} parent=27 // pred_region
          %248 = dma.done %s241, 128
        $region36: #{tpu_custom_call.1} parent=27 // pred_fallthru
          _
        %s249 = sand.u32 %s44, 1
        %s250 = scalar_lea.sflag [#allocation6], %s249
        %s251 = sand.u32 %s44, 1
        %s252 = smul.addr %s251, 8
        %s253 = scalar_lea.vmem [#allocation5], %s252
        %p254 = pneg %p57
        %p255 = pneg %p54
        %s256 = sand.u32 %s72, 1
        %s257 = scalar_lea.sflag [#allocation8], %s256
        %s258 = sand.u32 %s72, 1
        %s259 = smul.addr %s258, 8
        %s260 = scalar_lea.vmem [#allocation7], %s259
        %p261 = pneg %p85
        %p262 = pneg %p82
        %p263 = pneg %p111
        %p264 = pneg %p108
        %p265 = scmp.lt.s32.totalorder %s26, 1
        %s266 = scalar_select %p265, %s26, 1
        %s267 = smul.addr %s266, 4
        %s268 = scalar_lea.vmem %s2, %s267
        %p269 = pneg %p137
        %p270 = pneg %p134
        %p271 = scmp.lt.s32.totalorder %s26, 1
        %s272 = scalar_select %p271, %s26, 1
        %s273 = smul.addr %s272, 4
        %s274 = scalar_lea.vmem %s3, %s273
        %p275 = pneg %p163
        %p276 = pneg %p160
        %p277 = scmp.lt.s32.totalorder %s26, 1
        %s278 = scalar_select %p277, %s26, 1
        %s279 = smul.addr %s278, 4
        %s280 = scalar_lea.vmem %s4, %s279
        %s281 = smul.u32 2, %s27
        %s282 = smul.u32 2, %s27
        %p283 = scmp.lt.s32.totalorder %s26, 1
        %s284 = scalar_select %p283, %s26, 1
        %s285 = smul.addr %s284, 4
        %s286 = scalar_lea.vmem %s2, %s285
        %p287 = scmp.lt.s32.totalorder %s26, 1
        %s288 = scalar_select %p287, %s26, 1
        %s289 = smul.addr %s288, 4
        %s290 = scalar_lea.vmem %s3, %s289
        %p291 = scmp.lt.s32.totalorder %s26, 1
        %s292 = scalar_select %p291, %s26, 1
        %s293 = smul.addr %s292, 4
        %s294 = scalar_lea.vmem %s4, %s293
        %p295 = scmp.eq.s32.totalorder %s27, 0
        // Predicated region
        $region37: #{tpu_custom_call.1} parent=27 // pred_check
          %p296 = pneg %p295
        $region38: #{tpu_custom_call.1} parent=27 // pred_check_branch
          %298 = sbr.rel (%p296) target = $region40
        $region39: #{tpu_custom_call.1} parent=27 // pred_region
          %vm299 = vcmask 3072
          %300 = vst.msk [vmem:[#allocation2] sm:$0xf] %vm299, 0.0
          %301 = vst.msk [vmem:[#allocation3] sm:$0xf] %vm299, 0.0
          %302 = vst.msk [vmem:[#allocation4] sm:$0xf] %vm299, 0.0
        $region40: #{tpu_custom_call.1} parent=27 // pred_fallthru
          _
        %v303 = vld [vmem:[%s235] sm:$0xff]
        %v304 = vld [vmem:[%s244] sm:$0xff]
        %v305 = vxor.u32 %v303, 2147483648
        %v306 = vmul.f32 %v305, 1.442695
        %v307 = vpow.pop %v306
        %v308 = vadd.f32 %v307, 1.0
        %v309 = vrcp.pop %v308
        %v310 = vmul.f32 1.0, %v309
        %v311 = vld [vmem:[#allocation2] sm:$0xf]
        %v312 = vmul.f32 %v310, %v304
        %v314 = vcombine.high %v312, %v312
        %vm316 = vcmask 1043456
        %v317 = vsel %vm316, %v312, 0.0
        %v318 = vsel %vm316, %v314, 0.0
        %v319 = vadd.f32 %v317, %v318
        %320 = vadd.xlane.f32.xlu0 %v319
        %v321 = vpop.xlane.xlu0 %320
        %v322 = vadd.f32 %v311, %v321
        %vm323 = vcmask 3072
        %324 = vst.msk [vmem:[#allocation2] sm:$0xf] %vm323, %v322
        %v325 = vld [vmem:[#allocation3] sm:$0xf]
        %v326 = vmul.f32 %v310, %v310
        %v328 = vcombine.high %v326, %v326
        %v330 = vsel %vm316, %v326, 0.0
        %v331 = vsel %vm316, %v328, 0.0
        %v332 = vadd.f32 %v330, %v331
        %333 = vadd.xlane.f32.xlu0 %v332
        %v334 = vpop.xlane.xlu0 %333
        %v335 = vadd.f32 %v325, %v334
        %336 = vst.msk [vmem:[#allocation3] sm:$0xf] %vm323, %v335
        %v337 = vld [vmem:[#allocation4] sm:$0xf]
        %v338 = vmul.f32 %v304, %v304
        %v340 = vcombine.high %v338, %v338
        %v342 = vsel %vm316, %v338, 0.0
        %v343 = vsel %vm316, %v340, 0.0
        %v344 = vadd.f32 %v342, %v343
        %345 = vadd.xlane.f32.xlu0 %v344
        %v346 = vpop.xlane.xlu0 %345
        %v347 = vadd.f32 %v337, %v346
        %348 = vst.msk [vmem:[#allocation4] sm:$0xf] %vm323, %v347
        // Predicated region
        $region41: #{tpu_custom_call.1} parent=27 // pred_check
          %p349 = pneg %p295
        $region42: #{tpu_custom_call.1} parent=27 // pred_check_branch
          %351 = sbr.rel (%p349) target = $region44
        $region43: #{tpu_custom_call.1} parent=27 // pred_region
          %v352 = vld [vmem:[#allocation2] sm:$0xf]
          %353 = vst.msk [vmem:[%s286] sm:$0xf] %vm323, %v352
          %v354 = vld [vmem:[#allocation3] sm:$0xf]
          %355 = vst.msk [vmem:[%s290] sm:$0xf] %vm323, %v354
          %v356 = vld [vmem:[#allocation4] sm:$0xf]
          %357 = vst.msk [vmem:[%s294] sm:$0xf] %vm323, %v356
        $region44: #{tpu_custom_call.1} parent=27 // pred_fallthru
          _
        %p358 = scmp.lt.s32.totalorder %s26, 1
        %s359 = scalar_select %p358, %s26, 1
        %s360 = smul.addr %s359, 4
        %s361 = scalar_lea.vmem %s2, %s360
        %p362 = scmp.lt.s32.totalorder %s26, 1
        %s363 = scalar_select %p362, %s26, 1
        %s364 = smul.addr %s363, 4
        %s365 = scalar_lea.vmem %s3, %s364
        %p366 = scmp.lt.s32.totalorder %s26, 1
        %s367 = scalar_select %p366, %s26, 1
        %s368 = smul.addr %s367, 4
        %s369 = scalar_lea.vmem %s4, %s368
        // Predicated region
        $region45: #{tpu_custom_call.1} parent=27 // pred_check
          %p370 = pneg %p108
        $region46: #{tpu_custom_call.1} parent=27 // pred_check_branch
          %372 = sbr.rel (%p370) target = $region48
        $region47: #{tpu_custom_call.1} parent=27 // pred_region
          _
        $region48: #{tpu_custom_call.1} parent=27 // pred_fallthru
          _
        // Predicated region
        $region49: #{tpu_custom_call.1} parent=27 // pred_check
          %p373 = pneg %p134
        $region50: #{tpu_custom_call.1} parent=27 // pred_check_branch
          %375 = sbr.rel (%p373) target = $region52
        $region51: #{tpu_custom_call.1} parent=27 // pred_region
          _
        $region52: #{tpu_custom_call.1} parent=27 // pred_fallthru
          _
        // Predicated region
        $region53: #{tpu_custom_call.1} parent=27 // pred_check
          %p376 = pneg %p160
        $region54: #{tpu_custom_call.1} parent=27 // pred_check_branch
          %378 = sbr.rel (%p376) target = $region56
        $region55: #{tpu_custom_call.1} parent=27 // pred_region
          _
        $region56: #{tpu_custom_call.1} parent=27 // pred_fallthru
          _
      $region28: #{tpu_custom_call.1} parent=5 // pred_fallthru
        _
      %p379 = scmp.le.s32.totalorder 2, %s17
      // Predicated region
      $region57: #{tpu_custom_call.1} parent=5 // pred_check
        %p380 = pneg %p379
      $region58: #{tpu_custom_call.1} parent=5 // pred_check_branch
        %382 = sbr.rel (%p380) target = $region60
      $region59: #{tpu_custom_call.1} parent=5 // pred_region
        %s383 = ssub.s32 %s17, 2
        // Predicated region
        $region61: #{tpu_custom_call.1} parent=59 // pred_check
          %p384 = pneg %p114
        $region62: #{tpu_custom_call.1} parent=59 // pred_check_branch
          %386 = sbr.rel (%p384) target = $region64
        $region63: #{tpu_custom_call.1} parent=59 // pred_region
          %p387 = scmp.lt.s32.totalorder %s28, 1
          %s388 = scalar_select %p387, %s28, 1
          %s389 = smul.addr %s388, 4
          %s390 = scalar_lea.vmem %s2, %s389
        $region64: #{tpu_custom_call.1} parent=59 // pred_fallthru
          _
        // Predicated region
        $region65: #{tpu_custom_call.1} parent=59 // pred_check
          %p391 = pneg %p140
        $region66: #{tpu_custom_call.1} parent=59 // pred_check_branch
          %393 = sbr.rel (%p391) target = $region68
        $region67: #{tpu_custom_call.1} parent=59 // pred_region
          %p394 = scmp.lt.s32.totalorder %s28, 1
          %s395 = scalar_select %p394, %s28, 1
          %s396 = smul.addr %s395, 4
          %s397 = scalar_lea.vmem %s3, %s396
        $region68: #{tpu_custom_call.1} parent=59 // pred_fallthru
          _
        // Predicated region
        $region69: #{tpu_custom_call.1} parent=59 // pred_check
          %p398 = pneg %p166
        $region70: #{tpu_custom_call.1} parent=59 // pred_check_branch
          %400 = sbr.rel (%p398) target = $region72
        $region71: #{tpu_custom_call.1} parent=59 // pred_region
          %p401 = scmp.lt.s32.totalorder %s28, 1
          %s402 = scalar_select %p401, %s28, 1
          %s403 = smul.addr %s402, 4
          %s404 = scalar_lea.vmem %s4, %s403
        $region72: #{tpu_custom_call.1} parent=59 // pred_fallthru
          _
      $region60: #{tpu_custom_call.1} parent=5 // pred_fallthru
        _
    $region6: #{tpu_custom_call.1} parent=1 // loop_footer
      %s21 = sadd.s32 1, %s17
    $region7: #{tpu_custom_call.1} parent=1 // loop_footer_branch
      %16 = sbr.rel target = $region3
    $region8: #{tpu_custom_call.1} parent=1 // loop_exit
      _
    %405 = vsyncpa [#allocation6], 1
    %s406 = scalar_lea.sflag [#allocation6], 1
    %407 = vsyncpa %s406, 1
    %408 = vsyncpa [#allocation8], 1
    %s409 = scalar_lea.sflag [#allocation8], 1
    %410 = vsyncpa %s409, 1

</llo_original>
